<compile_context>
chip_gen: v5e
topology: v5e:2x2
jax: 0.10.0
libtpu: 0.0.40
codegen_flags: <defaults>
</compile_context>

<pallas_src>
import jax
import jax.numpy as jnp
from jax.experimental import pallas as pl
from jax.experimental.pallas import tpu as pltpu


def _conv3x3_pu_kernel(x_ref, t_ref, w_ref, o_ref):
    """One (batch, H-tile) grid step of Conv3x3(pad=1, no bias) + PixelUnshuffle(2).

    x_ref: (1, TH,  WHp, 4*Cin)  padded rows [t*TH, t*TH+TH) in the pre-shifted,
                                 column-quad packed layout (K entry (s*2+q)*Cin+ci
                                 holds padded column 2*w' + 2*s + q).
    t_ref: (1, 2,   WHp, 4*Cin)  2-row bottom halo: padded rows [(t+1)*TH, (t+1)*TH+2).
    w_ref: (3, 4*Cin, 2*Cout)    one matmul RHS per row tap dy.
    o_ref: (1, TH//2, 2, WHp, 2*Cout)  o[0,h,i,w',j*Cout+c] = conv[2h+i, 2w'+j, c].
    """
    th = x_ref.shape[1]
    wh = x_ref.shape[2]
    k4 = x_ref.shape[3]
    n2 = w_ref.shape[2]
    f32 = jnp.float32

    # Interior conv rows [0, TH-2): all three row taps come straight from x_ref.
    # Keep the accumulation as a plain sequential chain (MRB-friendly on v7x).
    if th > 2:
        mi = (th - 2) * wh
        acc = jnp.dot(x_ref[0, 0:th - 2].reshape(mi, k4), w_ref[0],
                      preferred_element_type=f32)
        acc += jnp.dot(x_ref[0, 1:th - 1].reshape(mi, k4), w_ref[1],
                       preferred_element_type=f32)
        acc += jnp.dot(x_ref[0, 2:th].reshape(mi, k4), w_ref[2],
                       preferred_element_type=f32)
        # Fused PixelUnshuffle(2): even/odd conv rows -> the "2" output axis.
        o_ref[0, 0:(th - 2) // 2] = acc.reshape(
            (th - 2) // 2, 2, wh, n2).astype(o_ref.dtype)

    # Bottom two conv rows [TH-2, TH): taps straddle x_ref and the 2-row halo.
    mb = 2 * wh
    lhs1 = jnp.concatenate([x_ref[0, th - 1:th], t_ref[0, 0:1]], axis=0)
    accb = jnp.dot(x_ref[0, th - 2:th].reshape(mb, k4), w_ref[0],
                   preferred_element_type=f32)
    accb += jnp.dot(lhs1.reshape(mb, k4), w_ref[1], preferred_element_type=f32)
    accb += jnp.dot(t_ref[0, 0:2].reshape(mb, k4), w_ref[2],
                    preferred_element_type=f32)
    o_ref[0, (th - 2) // 2:th // 2] = accb.reshape(1, 2, wh, n2).astype(o_ref.dtype)


def downsample_forward(x_nchw, conv_weight, *, compute_dtype=None, tile_h=None,
                       vmem_budget_bytes=None):
    """Downsample.forward: Conv2d(n_feat -> n_feat//2, 3x3, pad=1, bias=False)
    followed by PixelUnshuffle(2).  Input/Output are NCHW like PyTorch."""
    N, C, H, W = x_nchw.shape
    Cout = conv_weight.shape[0]
    assert conv_weight.shape == (Cout, C, 3, 3)
    assert H % 2 == 0 and W % 2 == 0, "PixelUnshuffle(2) needs even H and W"

    cdtype = x_nchw.dtype if compute_dtype is None else jnp.dtype(compute_dtype)
    out_dtype = x_nchw.dtype

    WH = W // 2                         # true output width
    WHp = ((WH + 7) // 8) * 8           # sublane-aligned output width (cropped later)
    K4 = 4 * C                          # matmul contraction dim
    N2 = 2 * Cout                       # matmul output dim
    Hp = H + 2                          # H-padded rows

    # ---- generation-aware VMEM numbers (64 MiB/TC on v7x, 128 MiB on v5e/v6e) ----
    try:
        vmem_cap = int(pltpu.get_tpu_info().vmem_capacity_bytes)
    except Exception:                   # be conservative if the query is unavailable
        vmem_cap = 64 * 1024 * 1024
    vmem_limit = min(vmem_cap * 3 // 4, 96 * 1024 * 1024)
    if vmem_budget_bytes is None:
        vmem_budget_bytes = min(32 * 1024 * 1024, vmem_cap // 3)

    isz = jnp.dtype(cdtype).itemsize
    osz = jnp.dtype(out_dtype).itemsize

    def _step_bytes(th):
        xin = 2 * (th + 2) * WHp * K4 * isz        # double-buffered input + halo blocks
        wgt = 2 * 3 * K4 * N2 * isz
        outb = 2 * th * WHp * N2 * osz             # double-buffered output block
        acc = 2 * th * WHp * N2 * 4                # f32 accumulator + reshape temp
        return xin + wgt + outb + acc

    # ---- pick an H tile: biggest that fits the budget, but leave >=4 grid steps ----
    if tile_h is None:
        cands = [d for d in range(2, H + 1, 2) if H % d == 0]
        fitting = [d for d in cands if _step_bytes(d) <= vmem_budget_bytes] or [cands[0]]
        tile_h = max(fitting)
        for want in (4, 2):             # keep both v7x TensorCores fed when N is small
            pref = [d for d in fitting if N * (H // d) >= want]
            if pref:
                tile_h = max(pref)
                break
    TH = int(tile_h)
    assert TH % 2 == 0 and H % TH == 0

    sb = _step_bytes(TH)
    if sb > vmem_limit:                 # fallback tiles must not be strangled by the limit
        vmem_limit = min(vmem_cap * 9 // 10, sb * 2)

    # ---- glue: NCHW -> NHWC, zero-pad H/W, pre-shifted column-quad pack (one pass) ----
    # lhs[n, y, w', (s*2+q)*C + ci] = X_padded[n, y, 2*w' + 2*s + q, ci]
    x_nhwc = jnp.transpose(x_nchw, (0, 2, 3, 1)).astype(cdtype)          # (N,H,W,C)
    x_p = jnp.pad(x_nhwc, ((0, 0), (1, 1), (1, 1 + 2 * (WHp - WH)), (0, 0)))
    a0 = x_p[:, :, 0:2 * WHp, :].reshape(N, Hp, WHp, 2 * C)
    a1 = x_p[:, :, 2:2 * WHp + 2, :].reshape(N, Hp, WHp, 2 * C)
    lhs = jnp.concatenate([a0, a1], axis=-1)                             # (N,Hp,WHp,4C)

    # ---- weight repack (tiny, traced once):
    # w3[dy, (s*2+q)*C+ci, j*Cout+c] = w[c, ci, dy, 2s+q-j]  (0 when dx outside [0,2])
    w = conv_weight.astype(cdtype)
    w2 = jnp.zeros((3, 2, 2, C, 2, Cout), cdtype)
    for dy in range(3):
        for s in range(2):
            for q in range(2):
                for j in range(2):
                    dx = 2 * s + q - j
                    if 0 <= dx <= 2:
                        w2 = w2.at[dy, s, q, :, j, :].set(
                            jnp.transpose(w[:, :, dy, dx], (1, 0)))
    w3 = w2.reshape(3, K4, N2)

    # ---- hot path: 3 accumulated MXU matmuls per (batch, H-tile) grid step ----
    grid = (N, H // TH)
    ker_out = pl.pallas_call(
        _conv3x3_pu_kernel,
        out_shape=jax.ShapeDtypeStruct((N, H // 2, 2, WHp, N2), out_dtype),
        grid=grid,
        in_specs=[
            # main TH-row window of padded rows [t*TH, t*TH+TH)
            pl.BlockSpec((1, TH, WHp, K4), lambda n, t: (n, t, 0, 0)),
            # 2-row bottom halo: padded rows [(t+1)*TH, (t+1)*TH+2) from the same array
            pl.BlockSpec((1, 2, WHp, K4),
                         lambda n, t: (n, (t + 1) * (TH // 2), 0, 0)),
            # repacked weights, resident across the grid
            pl.BlockSpec((3, K4, N2), lambda n, t: (0, 0, 0)),
        ],
        out_specs=pl.BlockSpec((1, TH // 2, 2, WHp, N2),
                               lambda n, t: (n, t, 0, 0, 0)),
        compiler_params=pltpu.CompilerParams(
            dimension_semantics=("parallel", "parallel"),
            vmem_limit_bytes=int(vmem_limit),
        ),
    )(lhs, lhs, w3)

    # ---- glue: crop W pad, reorder channels, NHWC-ish -> NCHW (one transpose pass) ----
    if WHp != WH:
        ker_out = ker_out[:, :, :, :WH, :]
    out = ker_out.reshape(N, H // 2, 2, WH, 2, Cout)       # (n, h, i, w', j, c)
    out = jnp.transpose(out, (0, 5, 2, 4, 1, 3))            # (n, c, i, j, h, w')
    return out.reshape(N, 4 * Cout, H // 2, WH)             # channel = 4c + 2i + j


def _reference_forward(x, w):
    conv = jax.lax.conv_general_dilated(
        x, w, window_strides=(1, 1), padding=((1, 1), (1, 1)),
        dimension_numbers=("NCHW", "OIHW", "NCHW"),
        precision=jax.lax.Precision.HIGHEST)
    n, co, h, ww = conv.shape
    r = conv.reshape(n, co, h // 2, 2, ww // 2, 2)
    return r.transpose(0, 1, 3, 5, 2, 4).reshape(n, co * 4, h // 2, ww // 2)


if __name__ == "__main__":
    key = jax.random.PRNGKey(0)
    k1, k2, k3, k4 = jax.random.split(key, 4)
    fwd = jax.jit(downsample_forward, static_argnames=("compute_dtype", "tile_h",
                                                       "vmem_budget_bytes"))

    # Case 1: the shapes implied by the module (batch=2, n_feat=4, 16x16 spatial).
    N, n_feat, H, W = 2, 4, 16, 16
    x = jax.random.normal(k1, (N, n_feat, H, W), dtype=jnp.float32)
    cw = 0.1 * jax.random.normal(k2, (n_feat // 2, n_feat, 3, 3), dtype=jnp.float32)
    out = jax.block_until_ready(fwd(x, cw))
    assert out.shape == (N, 2 * n_feat, H // 2, W // 2), out.shape
    ref = jax.block_until_ready(_reference_forward(x, cw))
    assert jnp.allclose(out, ref, atol=1e-2, rtol=1e-2), float(
        jnp.max(jnp.abs(out - ref)))

    # Case 2: exercises the W-alignment pad/crop path and the minimal (TH=2) tile.
    N2_, nf2, H2, W2 = 1, 6, 8, 12
    x2 = jax.random.normal(k3, (N2_, nf2, H2, W2), dtype=jnp.float32)
    cw2 = 0.1 * jax.random.normal(k4, (nf2 // 2, nf2, 3, 3), dtype=jnp.float32)
    out2 = jax.block_until_ready(fwd(x2, cw2))
    ref2 = jax.block_until_ready(_reference_forward(x2, cw2))
    assert out2.shape == ref2.shape, (out2.shape, ref2.shape)
    assert jnp.allclose(out2, ref2, atol=1e-2, rtol=1e-2), float(
        jnp.max(jnp.abs(out2 - ref2)))

    print("KERNEL_OK")
</pallas_src>

<mosaic_0001>
module attributes {stable_mosaic.version = 11 : i64} {
  func.func @_conv3x3_pu_kernel(%arg0: i32, %arg1: i32, %arg2: memref<1x8x8x16xf32, #tpu.memory_space<vmem>>, %arg3: memref<1x2x8x16xf32, #tpu.memory_space<vmem>>, %arg4: memref<3x16x4xf32, #tpu.memory_space<vmem>>, %arg5: memref<1x4x2x8x4xf32, #tpu.memory_space<vmem>>) attributes {dimension_semantics = [#tpu.dimension_semantics<parallel>, #tpu.dimension_semantics<parallel>], iteration_bounds = array<i64: 2, 2>, scalar_prefetch = 0 : i64, scratch_operands = 0 : i64, tpu.core_type = #tpu.core_type<tc>, window_params = [{transform_indices = @transform_0, window_bounds = array<i64: 1, 8, 8, 16>}, {transform_indices = @transform_1, window_bounds = array<i64: 1, 2, 8, 16>}, {pipeline_mode = #tpu.pipeline_mode<synchronous>, transform_indices = @transform_2, window_bounds = array<i64: 3, 16, 4>}, {transform_indices = @transform_3, window_bounds = array<i64: 1, 4, 2, 8, 4>}]} {
    %c0 = arith.constant 0 : index
    %c0_0 = arith.constant 0 : index
    %c0_1 = arith.constant 0 : index
    %c0_2 = arith.constant 0 : index
    %0 = vector.load %arg2[%c0, %c0_0, %c0_1, %c0_2] : memref<1x8x8x16xf32, #tpu.memory_space<vmem>>, vector<1x6x8x16xf32>
    %1 = vector.shape_cast %0 : vector<1x6x8x16xf32> to vector<6x8x16xf32>
    %2 = vector.shape_cast %1 : vector<6x8x16xf32> to vector<48x16xf32>
    %c0_3 = arith.constant 0 : index
    %c0_4 = arith.constant 0 : index
    %c0_5 = arith.constant 0 : index
    %3 = vector.load %arg4[%c0_3, %c0_4, %c0_5] : memref<3x16x4xf32, #tpu.memory_space<vmem>>, vector<1x16x4xf32>
    %4 = vector.shape_cast %3 : vector<1x16x4xf32> to vector<16x4xf32>
    %cst = arith.constant dense<0.000000e+00> : vector<48x4xf32>
    %5 = tpu.matmul %2, %4, %cst {dimension_numbers = #tpu.dot_dimension_numbers<[1], [0], [0], [1], [0, 0, 1, 1], [], []>} : vector<48x16xf32>, vector<16x4xf32>, vector<48x4xf32> -> vector<48x4xf32>
    %c0_6 = arith.constant 0 : index
    %c1 = arith.constant 1 : index
    %c0_7 = arith.constant 0 : index
    %c0_8 = arith.constant 0 : index
    %6 = vector.load %arg2[%c0_6, %c1, %c0_7, %c0_8] : memref<1x8x8x16xf32, #tpu.memory_space<vmem>>, vector<1x6x8x16xf32>
    %7 = vector.shape_cast %6 : vector<1x6x8x16xf32> to vector<6x8x16xf32>
    %8 = vector.shape_cast %7 : vector<6x8x16xf32> to vector<48x16xf32>
    %c1_9 = arith.constant 1 : index
    %c0_10 = arith.constant 0 : index
    %c0_11 = arith.constant 0 : index
    %9 = vector.load %arg4[%c1_9, %c0_10, %c0_11] : memref<3x16x4xf32, #tpu.memory_space<vmem>>, vector<1x16x4xf32>
    %10 = vector.shape_cast %9 : vector<1x16x4xf32> to vector<16x4xf32>
    %cst_12 = arith.constant dense<0.000000e+00> : vector<48x4xf32>
    %11 = tpu.matmul %8, %10, %cst_12 {dimension_numbers = #tpu.dot_dimension_numbers<[1], [0], [0], [1], [0, 0, 1, 1], [], []>} : vector<48x16xf32>, vector<16x4xf32>, vector<48x4xf32> -> vector<48x4xf32>
    %12 = arith.addf %5, %11 : vector<48x4xf32>
    %c0_13 = arith.constant 0 : index
    %c2 = arith.constant 2 : index
    %c0_14 = arith.constant 0 : index
    %c0_15 = arith.constant 0 : index
    %13 = vector.load %arg2[%c0_13, %c2, %c0_14, %c0_15] : memref<1x8x8x16xf32, #tpu.memory_space<vmem>>, vector<1x6x8x16xf32>
    %14 = vector.shape_cast %13 : vector<1x6x8x16xf32> to vector<6x8x16xf32>
    %15 = vector.shape_cast %14 : vector<6x8x16xf32> to vector<48x16xf32>
    %c2_16 = arith.constant 2 : index
    %c0_17 = arith.constant 0 : index
    %c0_18 = arith.constant 0 : index
    %16 = vector.load %arg4[%c2_16, %c0_17, %c0_18] : memref<3x16x4xf32, #tpu.memory_space<vmem>>, vector<1x16x4xf32>
    %17 = vector.shape_cast %16 : vector<1x16x4xf32> to vector<16x4xf32>
    %cst_19 = arith.constant dense<0.000000e+00> : vector<48x4xf32>
    %18 = tpu.matmul %15, %17, %cst_19 {dimension_numbers = #tpu.dot_dimension_numbers<[1], [0], [0], [1], [0, 0, 1, 1], [], []>} : vector<48x16xf32>, vector<16x4xf32>, vector<48x4xf32> -> vector<48x4xf32>
    %19 = arith.addf %12, %18 : vector<48x4xf32>
    %20 = vector.shape_cast %19 : vector<48x4xf32> to vector<3x2x8x4xf32>
    %c0_20 = arith.constant 0 : index
    %c0_21 = arith.constant 0 : index
    %c0_22 = arith.constant 0 : index
    %c0_23 = arith.constant 0 : index
    %c0_24 = arith.constant 0 : index
    %21 = vector.load %arg5[%c0_20, %c0_21, %c0_22, %c0_23, %c0_24] : memref<1x4x2x8x4xf32, #tpu.memory_space<vmem>>, vector<1x3x2x8x4xf32>
    %22 = vector.shape_cast %21 : vector<1x3x2x8x4xf32> to vector<3x2x8x4xf32>
    %23 = vector.shape_cast %20 : vector<3x2x8x4xf32> to vector<1x3x2x8x4xf32>
    tpu.vector_store %arg5[%c0_20, %c0_21, %c0_22, %c0_23, %c0_24], %23 {strides = array<i32>} : memref<1x4x2x8x4xf32, #tpu.memory_space<vmem>>, vector<1x3x2x8x4xf32>,
    %c0_25 = arith.constant 0 : index
    %c7 = arith.constant 7 : index
    %c0_26 = arith.constant 0 : index
    %c0_27 = arith.constant 0 : index
    %24 = vector.load %arg2[%c0_25, %c7, %c0_26, %c0_27] : memref<1x8x8x16xf32, #tpu.memory_space<vmem>>, vector<1x1x8x16xf32>
    %25 = vector.shape_cast %24 : vector<1x1x8x16xf32> to vector<1x8x16xf32>
    %c0_28 = arith.constant 0 : index
    %c0_29 = arith.constant 0 : index
    %c0_30 = arith.constant 0 : index
    %c0_31 = arith.constant 0 : index
    %26 = vector.load %arg3[%c0_28, %c0_29, %c0_30, %c0_31] : memref<1x2x8x16xf32, #tpu.memory_space<vmem>>, vector<1x1x8x16xf32>
    %27 = vector.shape_cast %26 : vector<1x1x8x16xf32> to vector<1x8x16xf32>
    %28 = tpu.concatenate %25, %27 in 0 : vector<1x8x16xf32>, vector<1x8x16xf32> -> vector<2x8x16xf32>
    %c0_32 = arith.constant 0 : index
    %c6 = arith.constant 6 : index
    %c0_33 = arith.constant 0 : index
    %c0_34 = arith.constant 0 : index
    %29 = vector.load %arg2[%c0_32, %c6, %c0_33, %c0_34] : memref<1x8x8x16xf32, #tpu.memory_space<vmem>>, vector<1x2x8x16xf32>
    %30 = vector.shape_cast %29 : vector<1x2x8x16xf32> to vector<2x8x16xf32>
    %31 = vector.shape_cast %30 : vector<2x8x16xf32> to vector<16x16xf32>
    %c0_35 = arith.constant 0 : index
    %c0_36 = arith.constant 0 : index
    %c0_37 = arith.constant 0 : index
    %32 = vector.load %arg4[%c0_35, %c0_36, %c0_37] : memref<3x16x4xf32, #tpu.memory_space<vmem>>, vector<1x16x4xf32>
    %33 = vector.shape_cast %32 : vector<1x16x4xf32> to vector<16x4xf32>
    %cst_38 = arith.constant dense<0.000000e+00> : vector<16x4xf32>
    %34 = tpu.matmul %31, %33, %cst_38 {dimension_numbers = #tpu.dot_dimension_numbers<[1], [0], [0], [1], [0, 0, 1, 1], [], []>} : vector<16x16xf32>, vector<16x4xf32>, vector<16x4xf32> -> vector<16x4xf32>
    %35 = vector.shape_cast %28 : vector<2x8x16xf32> to vector<16x16xf32>
    %c1_39 = arith.constant 1 : index
    %c0_40 = arith.constant 0 : index
    %c0_41 = arith.constant 0 : index
    %36 = vector.load %arg4[%c1_39, %c0_40, %c0_41] : memref<3x16x4xf32, #tpu.memory_space<vmem>>, vector<1x16x4xf32>
    %37 = vector.shape_cast %36 : vector<1x16x4xf32> to vector<16x4xf32>
    %cst_42 = arith.constant dense<0.000000e+00> : vector<16x4xf32>
    %38 = tpu.matmul %35, %37, %cst_42 {dimension_numbers = #tpu.dot_dimension_numbers<[1], [0], [0], [1], [0, 0, 1, 1], [], []>} : vector<16x16xf32>, vector<16x4xf32>, vector<16x4xf32> -> vector<16x4xf32>
    %39 = arith.addf %34, %38 : vector<16x4xf32>
    %c0_43 = arith.constant 0 : index
    %c0_44 = arith.constant 0 : index
    %c0_45 = arith.constant 0 : index
    %c0_46 = arith.constant 0 : index
    %40 = vector.load %arg3[%c0_43, %c0_44, %c0_45, %c0_46] : memref<1x2x8x16xf32, #tpu.memory_space<vmem>>, vector<1x2x8x16xf32>
    %41 = vector.shape_cast %40 : vector<1x2x8x16xf32> to vector<2x8x16xf32>
    %42 = vector.shape_cast %41 : vector<2x8x16xf32> to vector<16x16xf32>
    %c2_47 = arith.constant 2 : index
    %c0_48 = arith.constant 0 : index
    %c0_49 = arith.constant 0 : index
    %43 = vector.load %arg4[%c2_47, %c0_48, %c0_49] : memref<3x16x4xf32, #tpu.memory_space<vmem>>, vector<1x16x4xf32>
    %44 = vector.shape_cast %43 : vector<1x16x4xf32> to vector<16x4xf32>
    %cst_50 = arith.constant dense<0.000000e+00> : vector<16x4xf32>
    %45 = tpu.matmul %42, %44, %cst_50 {dimension_numbers = #tpu.dot_dimension_numbers<[1], [0], [0], [1], [0, 0, 1, 1], [], []>} : vector<16x16xf32>, vector<16x4xf32>, vector<16x4xf32> -> vector<16x4xf32>
    %46 = arith.addf %39, %45 : vector<16x4xf32>
    %47 = vector.shape_cast %46 : vector<16x4xf32> to vector<1x2x8x4xf32>
    %c0_51 = arith.constant 0 : index
    %c3 = arith.constant 3 : index
    %c0_52 = arith.constant 0 : index
    %c0_53 = arith.constant 0 : index
    %c0_54 = arith.constant 0 : index
    %48 = vector.load %arg5[%c0_51, %c3, %c0_52, %c0_53, %c0_54] : memref<1x4x2x8x4xf32, #tpu.memory_space<vmem>>, vector<1x1x2x8x4xf32>
    %49 = vector.shape_cast %48 : vector<1x1x2x8x4xf32> to vector<1x2x8x4xf32>
    %50 = vector.shape_cast %47 : vector<1x2x8x4xf32> to vector<1x1x2x8x4xf32>
    tpu.vector_store %arg5[%c0_51, %c3, %c0_52, %c0_53, %c0_54], %50 {strides = array<i32>} : memref<1x4x2x8x4xf32, #tpu.memory_space<vmem>>, vector<1x1x2x8x4xf32>,
    return
  }
  func.func @transform_0(%arg0: i32, %arg1: i32) -> (i32, i32, i32, i32) {
    %c0_i32 = arith.constant 0 : i32
    %c0_i32_0 = arith.constant 0 : i32
    %c0_i32_1 = arith.constant 0 : i32
    return %arg0, %arg1, %c0_i32, %c0_i32_0 : i32, i32, i32, i32
  }
  func.func @transform_1(%arg0: i32, %arg1: i32) -> (i32, i32, i32, i32) {
    %c1_i32 = arith.constant 1 : i32
    %0 = arith.addi %arg1, %c1_i32 : i32
    %c4_i32 = arith.constant 4 : i32
    %1 = arith.muli %0, %c4_i32 : i32
    %c0_i32 = arith.constant 0 : i32
    %c0_i32_0 = arith.constant 0 : i32
    %c0_i32_1 = arith.constant 0 : i32
    return %arg0, %1, %c0_i32, %c0_i32_0 : i32, i32, i32, i32
  }
  func.func @transform_2(%arg0: i32, %arg1: i32) -> (i32, i32, i32) {
    %c0_i32 = arith.constant 0 : i32
    %c0_i32_0 = arith.constant 0 : i32
    %c0_i32_1 = arith.constant 0 : i32
    %c0_i32_2 = arith.constant 0 : i32
    return %c0_i32, %c0_i32_0, %c0_i32_1 : i32, i32, i32
  }
  func.func @transform_3(%arg0: i32, %arg1: i32) -> (i32, i32, i32, i32, i32) {
    %c0_i32 = arith.constant 0 : i32
    %c0_i32_0 = arith.constant 0 : i32
    %c0_i32_1 = arith.constant 0 : i32
    %c0_i32_2 = arith.constant 0 : i32
    return %arg0, %arg1, %c0_i32, %c0_i32_0, %c0_i32_1 : i32, i32, i32, i32, i32
  }
}

</mosaic_0001>

<llo_original>
// kernel: downsample_forward.1
$region0: #{downsample_forward.1}
  #allocation0 [shape = 'u32[]', space=smem, size = 0x4, offset = 0x4, fixed_abs, tag = 'smem constant byte address 0x4 - core index']
  #allocation1 [shape = 'u32[72,128]{1,0:T(1,128)}', space=vmem, size = 0x9000, scoped, tag = 'internal scratch']
  %s0 = inlined_call_operand.vmem [shape: f32[2,18,8,16], index: 0, kind: input, shape index: {}, may-alias: {0,1}]
  %s1 = inlined_call_operand.vmem [shape: f32[2,18,8,16], index: 1, kind: input, shape index: {}, may-alias: {0,1}]
  %s2 = inlined_call_operand.vmem [shape: f32[3,16,4], index: 2, kind: input, shape index: {}]
  %s3 = inlined_call_operand.vmem [shape: f32[2,8,2,8,4], index: 3, kind: output, shape index: {}]
  %s4 = sld [smem:[#allocation0]]
  $region45: #{downsample_forward.1} parent=0
    _
  %s6 = ssub.s32 1, %s4
  %s7 = scalar_select 0, %s6, %s4
  loop: start=0, step=1, limit=6
  $region2: #{downsample_forward.1} parent=0 // loop_pre_header
    _
  $region3: #{downsample_forward.1} parent=0 // loop_header
    %s9 = sphi 0, %s13
    %p10 = scmp.ge.s32.totalorder %s9, 6
    %s16 = sphi 0, %s28
    %s17 = sphi 0, %s24
    %s18 = sphi 0, %s16
    %s19 = sphi 0, %s17
    %s20 = sphi 0, %s18
    %s21 = sphi 0, %s19
    %s33 = sphi 0, %s35
    %s36 = sphi 0, %s33
    %s37 = sphi 0, %s36
    %s53 = sphi 0, %s37
    %s65 = sphi 0, %s67
    %s68 = sphi 0, %s65
    %s69 = sphi 0, %s68
    %s85 = sphi 0, %s69
    %s89 = sphi 0, %s89
    %s91 = sphi 0, %s89
    %s92 = sphi 0, %s91
    %s106 = sphi 0, %s92
    %s114 = sphi 0, %s116
    %s117 = sphi 0, %s114
    %s118 = sphi 0, %s117
    %s134 = sphi 0, %s118
  $region4: #{downsample_forward.1} parent=0 // loop_header_branch
    %12 = sbr.rel (%p10) target = $region8
  $region5: #{downsample_forward.1} parent=0 // loop_body
    %s14 = ssub.s32 %s9, 1
    %s15 = ssub.s32 %s9, 2
    %s22 = sadd.s32 1, %s17
    %p23 = scmp.ge.s32.totalorder %s22, 2
    %s24 = scalar_select %p23, 0, %s22
    %s25 = sadd.s32 1, %s16
    %s26 = scalar_select %p23, %s25, %s16
    %p27 = scmp.ge.s32.totalorder %s26, 2
    %s28 = scalar_select %p27, 0, %s26
    %s29 = ssub.s32 %s16, %s28
    %s30 = ssub.s32 %s17, %s24
    %s31 = sor.u32 %s29, %s30
    %p32 = scmp.eq.s32.totalorder %s31, 0
    %s34 = sadd.s32 %s33, 1
    %s35 = scalar_select %p32, %s33, %s34
    %p38 = pneg %p32
    %p39 = scmp.eq.s32.totalorder %s9, 3
    %p40 = por %p38, %p39
    %p41 = scmp.ne.s32.totalorder %s33, %s36
    %p42 = scmp.eq.s32.totalorder %s9, 0
    %p43 = por %p41, %p42
    %p44 = scmp.ne.s32.totalorder %s33, %s36
    %p45 = scmp.eq.s32.totalorder %s14, 3
    %p46 = por %p44, %p45
    %p47 = scmp.ne.s32.totalorder %s36, %s37
    %p48 = scmp.eq.s32.totalorder %s14, 0
    %p49 = por %p47, %p48
    %p50 = scmp.ne.s32.totalorder %s36, %s37
    %p51 = scmp.eq.s32.totalorder %s15, 3
    %p52 = por %p50, %p51
    %p54 = scmp.ne.s32.totalorder %s37, %s53
    %p55 = scmp.eq.s32.totalorder %s15, 0
    %p56 = por %p54, %p55
    %s57 = sadd.s32 %s17, 1
    %s58 = smul.u32 %s57, 4
    %s59 = sadd.s32 %s24, 1
    %s60 = smul.u32 %s59, 4
    %s61 = ssub.s32 %s16, %s28
    %s62 = ssub.s32 %s58, %s60
    %s63 = sor.u32 %s61, %s62
    %p64 = scmp.eq.s32.totalorder %s63, 0
    %s66 = sadd.s32 %s65, 1
    %s67 = scalar_select %p64, %s65, %s66
    %p70 = pneg %p64
    %p71 = scmp.eq.s32.totalorder %s9, 3
    %p72 = por %p70, %p71
    %p73 = scmp.ne.s32.totalorder %s65, %s68
    %p74 = scmp.eq.s32.totalorder %s9, 0
    %p75 = por %p73, %p74
    %p76 = scmp.ne.s32.totalorder %s65, %s68
    %p77 = scmp.eq.s32.totalorder %s14, 3
    %p78 = por %p76, %p77
    %p79 = scmp.ne.s32.totalorder %s68, %s69
    %p80 = scmp.eq.s32.totalorder %s14, 0
    %p81 = por %p79, %p80
    %p82 = scmp.ne.s32.totalorder %s68, %s69
    %p83 = scmp.eq.s32.totalorder %s15, 3
    %p84 = por %p82, %p83
    %p86 = scmp.ne.s32.totalorder %s69, %s85
    %p87 = scmp.eq.s32.totalorder %s15, 0
    %p88 = por %p86, %p87
    %s90 = sadd.s32 %s89, 1
    %p93 = scmp.eq.s32.totalorder %s9, 3
    %p94 = scmp.ne.s32.totalorder %s89, %s91
    %p95 = scmp.eq.s32.totalorder %s9, 0
    %p96 = por %p94, %p95
    %p97 = scmp.ne.s32.totalorder %s89, %s91
    %p98 = scmp.eq.s32.totalorder %s14, 3
    %p99 = por %p97, %p98
    %p100 = scmp.ne.s32.totalorder %s91, %s92
    %p101 = scmp.eq.s32.totalorder %s14, 0
    %p102 = por %p100, %p101
    %p103 = scmp.ne.s32.totalorder %s91, %s92
    %p104 = scmp.eq.s32.totalorder %s15, 3
    %p105 = por %p103, %p104
    %p107 = scmp.ne.s32.totalorder %s92, %s106
    %p108 = scmp.eq.s32.totalorder %s15, 0
    %p109 = por %p107, %p108
    %s110 = ssub.s32 %s16, %s28
    %s111 = ssub.s32 %s17, %s24
    %s112 = sor.u32 %s110, %s111
    %p113 = scmp.eq.s32.totalorder %s112, 0
    %s115 = sadd.s32 %s114, 1
    %s116 = scalar_select %p113, %s114, %s115
    %p119 = pneg %p113
    %p120 = scmp.eq.s32.totalorder %s9, 3
    %p121 = por %p119, %p120
    %p122 = scmp.ne.s32.totalorder %s114, %s117
    %p123 = scmp.eq.s32.totalorder %s9, 0
    %p124 = por %p122, %p123
    %p125 = scmp.ne.s32.totalorder %s114, %s117
    %p126 = scmp.eq.s32.totalorder %s14, 3
    %p127 = por %p125, %p126
    %p128 = scmp.ne.s32.totalorder %s117, %s118
    %p129 = scmp.eq.s32.totalorder %s14, 0
    %p130 = por %p128, %p129
    %p131 = scmp.ne.s32.totalorder %s117, %s118
    %p132 = scmp.eq.s32.totalorder %s15, 3
    %p133 = por %p131, %p132
    %p135 = scmp.ne.s32.totalorder %s118, %s134
    %p136 = scmp.eq.s32.totalorder %s15, 0
    %p137 = por %p135, %p136
    %p138 = scmp.le.s32.totalorder 1, %s9
    %p139 = scmp.lt.s32.totalorder %s9, 5
    %p140 = pnand %p138, %p139
    %p141 = pneg %p140
    // Predicated region
    $region9: #{downsample_forward.1} parent=5 // pred_check
      _
    $region10: #{downsample_forward.1} parent=5 // pred_check_branch
      %143 = sbr.rel (%p140) target = $region12
    $region11: #{downsample_forward.1} parent=5 // pred_region
      %s144 = ssub.s32 %s9, 1
      // Predicated region
      $region13: #{downsample_forward.1} parent=11 // pred_check
        %p145 = pneg %p102
      $region14: #{downsample_forward.1} parent=11 // pred_check_branch
        %147 = sbr.rel (%p145) target = $region16
      $region15: #{downsample_forward.1} parent=11 // pred_region
        _
      $region16: #{downsample_forward.1} parent=11 // pred_fallthru
        _
    $region12: #{downsample_forward.1} parent=5 // pred_fallthru
      _
    %p148 = scmp.lt.s32.totalorder %s9, 4
    // Predicated region
    $region17: #{downsample_forward.1} parent=5 // pred_check
      %p149 = pneg %p148
    $region18: #{downsample_forward.1} parent=5 // pred_check_branch
      %151 = sbr.rel (%p149) target = $region20
    $region19: #{downsample_forward.1} parent=5 // pred_region
      // Predicated region
      $region21: #{downsample_forward.1} parent=19 // pred_check
        %p152 = pneg %p43
      $region22: #{downsample_forward.1} parent=19 // pred_check_branch
        %154 = sbr.rel (%p152) target = $region24
      $region23: #{downsample_forward.1} parent=19 // pred_region
        %s155 = smul.u32 8, %s17
        %s156 = ssub.s32 18, %s155
        %p157 = scmp.lt.s32.totalorder %s156, 8
        %s158 = scalar_select %p157, %s156, 8
        %s159 = smul.u32 8, %s158
        %p160 = scmp.lt.s32.totalorder %s16, 1
        %s161 = scalar_select %p160, %s16, 1
        %p162 = scmp.lt.s32.totalorder %s155, 17
        %s163 = scalar_select %p162, %s155, 17
        %s164 = smul.addr %s161, 18
        %s165 = sadd.s32 %s163, %s164
        %s166 = smul.addr %s165, 8
        %s167 = scalar_lea.vmem %s0, %s166
        %s168 = smul.u32 8, %s17
        %s169 = ssub.s32 18, %s168
        %p170 = scmp.lt.s32.totalorder %s169, 8
        %s171 = scalar_select %p170, %s169, 8
        %s172 = smul.u32 8, %s171
      $region24: #{downsample_forward.1} parent=19 // pred_fallthru
        _
      // Predicated region
      $region25: #{downsample_forward.1} parent=19 // pred_check
        %p173 = pneg %p75
      $region26: #{downsample_forward.1} parent=19 // pred_check_branch
        %175 = sbr.rel (%p173) target = $region28
      $region27: #{downsample_forward.1} parent=19 // pred_region
        %s176 = sadd.s32 %s17, 1
        %s177 = smul.u32 %s176, 4
        %s178 = smul.u32 2, %s177
        %p179 = scmp.lt.s32.totalorder %s16, 1
        %s180 = scalar_select %p179, %s16, 1
        %p181 = scmp.lt.s32.totalorder %s178, 17
        %s182 = scalar_select %p181, %s178, 17
        %s183 = smul.addr %s180, 18
        %s184 = sadd.s32 %s182, %s183
        %s185 = smul.addr %s184, 8
        %s186 = scalar_lea.vmem %s1, %s185
        %s187 = sadd.s32 %s17, 1
        %s188 = smul.u32 %s187, 4
        %s189 = smul.u32 2, %s188
      $region28: #{downsample_forward.1} parent=19 // pred_fallthru
        _
    $region20: #{downsample_forward.1} parent=5 // pred_fallthru
      _
    %p190 = scmp.le.s32.totalorder 1, %s9
    %p191 = scmp.lt.s32.totalorder %s9, 5
    %p192 = pnand %p190, %p191
    %p193 = pneg %p192
    // Predicated region
    $region29: #{downsample_forward.1} parent=5 // pred_check
      _
    $region30: #{downsample_forward.1} parent=5 // pred_check_branch
      %195 = sbr.rel (%p192) target = $region32
    $region31: #{downsample_forward.1} parent=5 // pred_region
      %s196 = ssub.s32 %s9, 1
      %s197 = smul.u32 8, %s19
      %s198 = ssub.s32 18, %s197
      %p199 = scmp.lt.s32.totalorder %s198, 8
      %s200 = scalar_select %p199, %s198, 8
      %s201 = smul.u32 8, %s200
      %p202 = scmp.lt.s32.totalorder %s18, 1
      %s203 = scalar_select %p202, %s18, 1
      %p204 = scmp.lt.s32.totalorder %s197, 17
      %s205 = scalar_select %p204, %s197, 17
      %s206 = smul.addr %s203, 18
      %s207 = sadd.s32 %s205, %s206
      %s208 = smul.addr %s207, 8
      %s209 = scalar_lea.vmem %s0, %s208
      %p210 = pneg %p49
      %p211 = pneg %p46
      %s212 = sadd.s32 %s19, 1
      %s213 = smul.u32 %s212, 4
      %s214 = smul.u32 2, %s213
      %p215 = scmp.lt.s32.totalorder %s18, 1
      %s216 = scalar_select %p215, %s18, 1
      %p217 = scmp.lt.s32.totalorder %s214, 17
      %s218 = scalar_select %p217, %s214, 17
      %s219 = smul.addr %s216, 18
      %s220 = sadd.s32 %s218, %s219
      %s221 = smul.addr %s220, 8
      %s222 = scalar_lea.vmem %s1, %s221
      %p223 = pneg %p81
      %p224 = pneg %p78
      %p225 = pneg %p102
      %p226 = pneg %p99
      %p227 = pneg %p130
      %p228 = pneg %p127
      %s229 = smul.u32 4, %s19
      %p230 = scmp.lt.s32.totalorder %s18, 1
      %s231 = scalar_select %p230, %s18, 1
      %p232 = scmp.lt.s32.totalorder %s229, 7
      %s233 = scalar_select %p232, %s229, 7
      %s234 = smul.addr %s233, 2
      %s235 = smul.addr %s231, 16
      %s236 = sadd.s32 %s234, %s235
      %s237 = smul.addr %s236, 8
      %s238 = scalar_lea.vmem %s3, %s237
      %s239 = smul.u32 8, %s19
      %s240 = ssub.s32 18, %s239
      %p241 = scmp.lt.s32.totalorder %s240, 8
      %s242 = scalar_select %p241, %s240, 8
      %s243 = smul.u32 8, %s242
      %p244 = scmp.lt.s32.totalorder %s18, 1
      %s245 = scalar_select %p244, %s18, 1
      %p246 = scmp.lt.s32.totalorder %s239, 17
      %s247 = scalar_select %p246, %s239, 17
      %s248 = smul.addr %s245, 18
      %s249 = sadd.s32 %s247, %s248
      %s250 = smul.addr %s249, 8
      %s251 = scalar_lea.vmem %s0, %s250
      %s252 = smul.u32 8, %s19
      %s253 = ssub.s32 18, %s252
      %p254 = scmp.lt.s32.totalorder %s253, 8
      %s255 = scalar_select %p254, %s253, 8
      %s256 = smul.u32 8, %s255
      %s257 = sadd.s32 %s19, 1
      %s258 = smul.u32 %s257, 4
      %s259 = smul.u32 2, %s258
      %p260 = scmp.lt.s32.totalorder %s18, 1
      %s261 = scalar_select %p260, %s18, 1
      %p262 = scmp.lt.s32.totalorder %s259, 17
      %s263 = scalar_select %p262, %s259, 17
      %s264 = smul.addr %s261, 18
      %s265 = sadd.s32 %s263, %s264
      %s266 = smul.addr %s265, 8
      %s267 = scalar_lea.vmem %s1, %s266
      %s268 = sadd.s32 %s19, 1
      %s269 = smul.u32 %s268, 4
      %s270 = smul.u32 2, %s269
      %s271 = smul.u32 4, %s19
      %p272 = scmp.lt.s32.totalorder %s18, 1
      %s273 = scalar_select %p272, %s18, 1
      %p274 = scmp.lt.s32.totalorder %s271, 7
      %s275 = scalar_select %p274, %s271, 7
      %s276 = smul.addr %s275, 2
      %s277 = smul.addr %s273, 16
      %s278 = sadd.s32 %s276, %s277
      %s279 = smul.addr %s278, 8
      %s280 = scalar_lea.vmem %s3, %s279
      %s281 = smul.u32 4, %s19
      %v282 = vld [vmem:[%s251] sm:$0xff]
      %v283 = vld [vmem:[%s251 + $0x8] sm:$0xff]
      %v284 = vld [vmem:[%s251 + $0x10] sm:$0xff]
      %v285 = vld [vmem:[%s251 + $0x18] sm:$0xff]
      %v286 = vld [vmem:[%s251 + $0x20] sm:$0xff]
      %v287 = vld [vmem:[%s251 + $0x28] sm:$0xff]
      %v288 = vld [vmem:[%s2] sm:$0xff]
      %v289 = vld [vmem:[%s2 + $0x8] sm:$0xff]
      %s290 = scalar_lea.vmem %s251, 8
      %v291 = vld [vmem:[%s290] sm:$0xff]
      %v292 = vld [vmem:[%s290 + $0x8] sm:$0xff]
      %v293 = vld [vmem:[%s290 + $0x10] sm:$0xff]
      %v294 = vld [vmem:[%s290 + $0x18] sm:$0xff]
      %v295 = vld [vmem:[%s290 + $0x20] sm:$0xff]
      %v296 = vld [vmem:[%s290 + $0x28] sm:$0xff]
      %s297 = scalar_lea.vmem %s2, 16
      %v298 = vld [vmem:[%s297] sm:$0xff]
      %v299 = vld [vmem:[%s297 + $0x8] sm:$0xff]
      %vm300 = vcmask 130048
      %v302 = vsel %vm300, %v291, 0
      %v305 = vsel %vm300, %v292, 0
      %v308 = vsel %vm300, %v293, 0
      %v311 = vsel %vm300, %v294, 0
      %v314 = vsel %vm300, %v295, 0
      %v317 = vsel %vm300, %v296, 0
      %319 = vmatpush.msra.mxu0 0.0
      %320 = vmatpush.msra.mxu0 0.0
      %321 = vmatpush.msra.mxu0 0.0
      %322 = vmatpush.msra.mxu0 0.0
      %323 = vmatpush.msra.mxu0 0.0
      %324 = vmatpush.msra.mxu0 0.0
      %325 = vmatpush.msra.mxu0 0.0
      %326 = vmatpush.msra.mxu0 0.0
      %327 = vmatpush.msra.mxu0 0.0
      %328 = vmatpush.msra.mxu0 0.0
      %329 = vmatpush.msra.mxu0 0.0
      %330 = vmatpush.msra.mxu0 0.0
      %331 = vmatpush.msra.mxu0 0.0
      %332 = vmatpush.msra.mxu0 0.0
      %333 = vmatpush.msra.mxu0 %v299
      %334 = vmatpush.msra.mxu0 %v298
      %335 = vmatmul.f32.gmra.mxu0 %v302
      %v336 = vpop.f32.mrf.mxu0
      %v337 = vadd.f32 0.0, %v336
      %338 = vmatmul.f32.gmra.mxu0 %v305
      %v339 = vpop.f32.mrf.mxu0
      %v340 = vadd.f32 0.0, %v339
      %341 = vmatmul.f32.gmra.mxu0 %v308
      %v342 = vpop.f32.mrf.mxu0
      %v343 = vadd.f32 0.0, %v342
      %344 = vmatmul.f32.gmra.mxu0 %v311
      %v345 = vpop.f32.mrf.mxu0
      %v346 = vadd.f32 0.0, %v345
      %347 = vmatmul.f32.gmra.mxu0 %v314
      %v348 = vpop.f32.mrf.mxu0
      %v349 = vadd.f32 0.0, %v348
      %350 = vmatmul.f32.gmra.mxu0 %v317
      %v351 = vpop.f32.mrf.mxu0
      %v352 = vadd.f32 0.0, %v351
      %353 = vdwg.mxu0
      %v355 = vsel %vm300, %v282, 0
      %v358 = vsel %vm300, %v283, 0
      %v361 = vsel %vm300, %v284, 0
      %v364 = vsel %vm300, %v285, 0
      %v367 = vsel %vm300, %v286, 0
      %v370 = vsel %vm300, %v287, 0
      %372 = vmatpush.msra.mxu0 0.0
      %373 = vmatpush.msra.mxu0 0.0
      %374 = vmatpush.msra.mxu0 0.0
      %375 = vmatpush.msra.mxu0 0.0
      %376 = vmatpush.msra.mxu0 0.0
      %377 = vmatpush.msra.mxu0 0.0
      %378 = vmatpush.msra.mxu0 0.0
      %379 = vmatpush.msra.mxu0 0.0
      %380 = vmatpush.msra.mxu0 0.0
      %381 = vmatpush.msra.mxu0 0.0
      %382 = vmatpush.msra.mxu0 0.0
      %383 = vmatpush.msra.mxu0 0.0
      %384 = vmatpush.msra.mxu0 0.0
      %385 = vmatpush.msra.mxu0 0.0
      %386 = vmatpush.msra.mxu0 %v289
      %387 = vmatpush.msra.mxu0 %v288
      %388 = vmatmul.f32.gmra.mxu0 %v355
      %v389 = vpop.f32.mrf.mxu0
      %v390 = vadd.f32 %v337, %v389
      %391 = vmatmul.f32.gmra.mxu0 %v358
      %v392 = vpop.f32.mrf.mxu0
      %v393 = vadd.f32 %v340, %v392
      %394 = vmatmul.f32.gmra.mxu0 %v361
      %v395 = vpop.f32.mrf.mxu0
      %v396 = vadd.f32 %v343, %v395
      %397 = vmatmul.f32.gmra.mxu0 %v364
      %v398 = vpop.f32.mrf.mxu0
      %v399 = vadd.f32 %v346, %v398
      %400 = vmatmul.f32.gmra.mxu0 %v367
      %v401 = vpop.f32.mrf.mxu0
      %v402 = vadd.f32 %v349, %v401
      %403 = vmatmul.f32.gmra.mxu0 %v370
      %v404 = vpop.f32.mrf.mxu0
      %v405 = vadd.f32 %v352, %v404
      %406 = vdwg.mxu0
      %s407 = scalar_lea.vmem %s251, 16
      %v408 = vld [vmem:[%s407] sm:$0xff]
      %v409 = vld [vmem:[%s407 + $0x8] sm:$0xff]
      %v410 = vld [vmem:[%s407 + $0x10] sm:$0xff]
      %v411 = vld [vmem:[%s407 + $0x18] sm:$0xff]
      %v412 = vld [vmem:[%s407 + $0x20] sm:$0xff]
      %v413 = vld [vmem:[%s407 + $0x28] sm:$0xff]
      %s414 = scalar_lea.vmem %s2, 32
      %v415 = vld [vmem:[%s414] sm:$0xff]
      %v416 = vld [vmem:[%s414 + $0x8] sm:$0xff]
      %v418 = vsel %vm300, %v408, 0
      %v421 = vsel %vm300, %v409, 0
      %v424 = vsel %vm300, %v410, 0
      %v427 = vsel %vm300, %v411, 0
      %v430 = vsel %vm300, %v412, 0
      %v433 = vsel %vm300, %v413, 0
      %435 = vmatpush.msra.mxu0 0.0
      %436 = vmatpush.msra.mxu0 0.0
      %437 = vmatpush.msra.mxu0 0.0
      %438 = vmatpush.msra.mxu0 0.0
      %439 = vmatpush.msra.mxu0 0.0
      %440 = vmatpush.msra.mxu0 0.0
      %441 = vmatpush.msra.mxu0 0.0
      %442 = vmatpush.msra.mxu0 0.0
      %443 = vmatpush.msra.mxu0 0.0
      %444 = vmatpush.msra.mxu0 0.0
      %445 = vmatpush.msra.mxu0 0.0
      %446 = vmatpush.msra.mxu0 0.0
      %447 = vmatpush.msra.mxu0 0.0
      %448 = vmatpush.msra.mxu0 0.0
      %449 = vmatpush.msra.mxu0 %v416
      %450 = vmatpush.msra.mxu0 %v415
      %451 = vmatmul.f32.gmra.mxu0 %v418
      %v452 = vpop.f32.mrf.mxu0
      %v453 = vadd.f32 0.0, %v452
      %454 = vmatmul.f32.gmra.mxu0 %v421
      %v455 = vpop.f32.mrf.mxu0
      %v456 = vadd.f32 0.0, %v455
      %457 = vmatmul.f32.gmra.mxu0 %v424
      %v458 = vpop.f32.mrf.mxu0
      %v459 = vadd.f32 0.0, %v458
      %460 = vmatmul.f32.gmra.mxu0 %v427
      %v461 = vpop.f32.mrf.mxu0
      %v462 = vadd.f32 0.0, %v461
      %463 = vmatmul.f32.gmra.mxu0 %v430
      %v464 = vpop.f32.mrf.mxu0
      %v465 = vadd.f32 0.0, %v464
      %466 = vmatmul.f32.gmra.mxu0 %v433
      %v467 = vpop.f32.mrf.mxu0
      %v468 = vadd.f32 0.0, %v467
      %469 = vdwg.mxu0
      %v470 = vadd.f32 %v390, %v453
      %v471 = vadd.f32 %v393, %v456
      %v472 = vadd.f32 %v396, %v459
      %v473 = vadd.f32 %v399, %v462
      %v474 = vadd.f32 %v402, %v465
      %v475 = vadd.f32 %v405, %v468
      %vm476 = vcmask 31744
      %477 = vst.msk [vmem:[%s280] sm:$0xff] %vm476, %v470
      %478 = vst.msk [vmem:[%s280 + $0x8] sm:$0xff] %vm476, %v471
      %479 = vst.msk [vmem:[%s280 + $0x10] sm:$0xff] %vm476, %v472
      %480 = vst.msk [vmem:[%s280 + $0x18] sm:$0xff] %vm476, %v473
      %481 = vst.msk [vmem:[%s280 + $0x20] sm:$0xff] %vm476, %v474
      %482 = vst.msk [vmem:[%s280 + $0x28] sm:$0xff] %vm476, %v475
      %s483 = scalar_lea.vmem %s251, 56
      %v484 = vld [vmem:[%s483] sm:$0xff]
      %v485 = vld [vmem:[%s267] sm:$0xff]
      %s486 = scalar_lea.vmem %s251, 48
      %v487 = vld [vmem:[%s486] sm:$0xff]
      %v488 = vld [vmem:[%s486 + $0x8] sm:$0xff]
      %v489 = vld [vmem:[%s2] sm:$0xff]
      %v490 = vld [vmem:[%s2 + $0x8] sm:$0xff]
      %v491 = vld [vmem:[%s297] sm:$0xff]
      %v492 = vld [vmem:[%s297 + $0x8] sm:$0xff]
      %v494 = vsel %vm300, %v484, 0
      %v497 = vsel %vm300, %v485, 0
      %499 = vmatpush.msra.mxu0 0.0
      %500 = vmatpush.msra.mxu0 0.0
      %501 = vmatpush.msra.mxu0 0.0
      %502 = vmatpush.msra.mxu0 0.0
      %503 = vmatpush.msra.mxu0 0.0
      %504 = vmatpush.msra.mxu0 0.0
      %505 = vmatpush.msra.mxu0 0.0
      %506 = vmatpush.msra.mxu0 0.0
      %507 = vmatpush.msra.mxu0 0.0
      %508 = vmatpush.msra.mxu0 0.0
      %509 = vmatpush.msra.mxu0 0.0
      %510 = vmatpush.msra.mxu0 0.0
      %511 = vmatpush.msra.mxu0 0.0
      %512 = vmatpush.msra.mxu0 0.0
      %513 = vmatpush.msra.mxu0 %v492
      %514 = vmatpush.msra.mxu0 %v491
      %515 = vmatmul.f32.gmra.mxu0 %v494
      %v516 = vpop.f32.mrf.mxu0
      %v517 = vadd.f32 0.0, %v516
      %518 = vmatmul.f32.gmra.mxu0 %v497
      %v519 = vpop.f32.mrf.mxu0
      %v520 = vadd.f32 0.0, %v519
      %521 = vdwg.mxu0
      %v523 = vsel %vm300, %v487, 0
      %v526 = vsel %vm300, %v488, 0
      %528 = vmatpush.msra.mxu0 0.0
      %529 = vmatpush.msra.mxu0 0.0
      %530 = vmatpush.msra.mxu0 0.0
      %531 = vmatpush.msra.mxu0 0.0
      %532 = vmatpush.msra.mxu0 0.0
      %533 = vmatpush.msra.mxu0 0.0
      %534 = vmatpush.msra.mxu0 0.0
      %535 = vmatpush.msra.mxu0 0.0
      %536 = vmatpush.msra.mxu0 0.0
      %537 = vmatpush.msra.mxu0 0.0
      %538 = vmatpush.msra.mxu0 0.0
      %539 = vmatpush.msra.mxu0 0.0
      %540 = vmatpush.msra.mxu0 0.0
      %541 = vmatpush.msra.mxu0 0.0
      %542 = vmatpush.msra.mxu0 %v490
      %543 = vmatpush.msra.mxu0 %v489
      %544 = vmatmul.f32.gmra.mxu0 %v523
      %v545 = vpop.f32.mrf.mxu0
      %v546 = vadd.f32 %v517, %v545
      %547 = vmatmul.f32.gmra.mxu0 %v526
      %v548 = vpop.f32.mrf.mxu0
      %v549 = vadd.f32 %v520, %v548
      %550 = vdwg.mxu0
      %v551 = vld [vmem:[%s267] sm:$0xff]
      %v552 = vld [vmem:[%s267 + $0x8] sm:$0xff]
      %v553 = vld [vmem:[%s414] sm:$0xff]
      %v554 = vld [vmem:[%s414 + $0x8] sm:$0xff]
      %v556 = vsel %vm300, %v551, 0
      %v559 = vsel %vm300, %v552, 0
      %561 = vmatpush.msra.mxu0 0.0
      %562 = vmatpush.msra.mxu0 0.0
      %563 = vmatpush.msra.mxu0 0.0
      %564 = vmatpush.msra.mxu0 0.0
      %565 = vmatpush.msra.mxu0 0.0
      %566 = vmatpush.msra.mxu0 0.0
      %567 = vmatpush.msra.mxu0 0.0
      %568 = vmatpush.msra.mxu0 0.0
      %569 = vmatpush.msra.mxu0 0.0
      %570 = vmatpush.msra.mxu0 0.0
      %571 = vmatpush.msra.mxu0 0.0
      %572 = vmatpush.msra.mxu0 0.0
      %573 = vmatpush.msra.mxu0 0.0
      %574 = vmatpush.msra.mxu0 0.0
      %575 = vmatpush.msra.mxu0 %v554
      %576 = vmatpush.msra.mxu0 %v553
      %577 = vmatmul.f32.gmra.mxu0 %v556
      %v578 = vpop.f32.mrf.mxu0
      %v579 = vadd.f32 0.0, %v578
      %580 = vmatmul.f32.gmra.mxu0 %v559
      %v581 = vpop.f32.mrf.mxu0
      %v582 = vadd.f32 0.0, %v581
      %583 = vdwg.mxu0
      %v584 = vadd.f32 %v546, %v579
      %v585 = vadd.f32 %v549, %v582
      %s586 = scalar_lea.vmem %s280, 48
      %587 = vst.msk [vmem:[%s586] sm:$0xff] %vm476, %v584
      %588 = vst.msk [vmem:[%s586 + $0x8] sm:$0xff] %vm476, %v585
      %s589 = smul.u32 4, %s19
      %p590 = scmp.lt.s32.totalorder %s18, 1
      %s591 = scalar_select %p590, %s18, 1
      %p592 = scmp.lt.s32.totalorder %s589, 7
      %s593 = scalar_select %p592, %s589, 7
      %s594 = smul.addr %s593, 2
      %s595 = smul.addr %s591, 16
      %s596 = sadd.s32 %s594, %s595
      %s597 = smul.addr %s596, 8
      %s598 = scalar_lea.vmem %s3, %s597
      // Predicated region
      $region33: #{downsample_forward.1} parent=31 // pred_check
        %p599 = pneg %p127
      $region34: #{downsample_forward.1} parent=31 // pred_check_branch
        %601 = sbr.rel (%p599) target = $region36
      $region35: #{downsample_forward.1} parent=31 // pred_region
        %s602 = smul.u32 4, %s19
      $region36: #{downsample_forward.1} parent=31 // pred_fallthru
        _
    $region32: #{downsample_forward.1} parent=5 // pred_fallthru
      _
    %p603 = scmp.le.s32.totalorder 2, %s9
    // Predicated region
    $region37: #{downsample_forward.1} parent=5 // pred_check
      %p604 = pneg %p603
    $region38: #{downsample_forward.1} parent=5 // pred_check_branch
      %606 = sbr.rel (%p604) target = $region40
    $region39: #{downsample_forward.1} parent=5 // pred_region
      %s607 = ssub.s32 %s9, 2
      // Predicated region
      $region41: #{downsample_forward.1} parent=39 // pred_check
        %p608 = pneg %p133
      $region42: #{downsample_forward.1} parent=39 // pred_check_branch
        %610 = sbr.rel (%p608) target = $region44
      $region43: #{downsample_forward.1} parent=39 // pred_region
        %s611 = smul.u32 4, %s21
        %p612 = scmp.lt.s32.totalorder %s20, 1
        %s613 = scalar_select %p612, %s20, 1
        %p614 = scmp.lt.s32.totalorder %s611, 7
        %s615 = scalar_select %p614, %s611, 7
        %s616 = smul.addr %s615, 2
        %s617 = smul.addr %s613, 16
        %s618 = sadd.s32 %s616, %s617
        %s619 = smul.addr %s618, 8
        %s620 = scalar_lea.vmem %s3, %s619
      $region44: #{downsample_forward.1} parent=39 // pred_fallthru
        _
    $region40: #{downsample_forward.1} parent=5 // pred_fallthru
      _
  $region6: #{downsample_forward.1} parent=0 // loop_footer
    %s13 = sadd.s32 1, %s9
  $region7: #{downsample_forward.1} parent=0 // loop_footer_branch
    %8 = sbr.rel target = $region3
  $region8: #{downsample_forward.1} parent=0 // loop_exit
    _

</llo_original>
